<compile_context>
chip_gen: v5e
topology: v5e:2x2
jax: 0.10.0
libtpu: 0.0.40
codegen_flags: <defaults>
</compile_context>

<pallas_src>
import math
from functools import partial

import jax
import jax.numpy as jnp
from jax.experimental import pallas as pl
from jax.experimental.pallas import tpu as pltpu

_VMEM_BUDGET = 40 * 1024 * 1024       # tile-buffer budget, well under v7x's 64 MiB/TC
_VMEM_HEADROOM = 4 * 1024 * 1024      # extra headroom for compiler-internal scratch
_VMEM_LIMIT_CAP = 48 * 1024 * 1024    # never request more than this (v7x-safe)


def _cdiv(a, b):
    return (a + b - 1) // b


def _round_up(x, m):
    return _cdiv(x, m) * m


def _sublane_multiple(dtype):
    # Sub-32-bit dtypes pack along sublanes: f32 -> 8, bf16 -> 16, int8/fp8 -> 32.
    return max(8, 32 // jnp.dtype(dtype).itemsize)


def _divisor_tiles(dim, candidates):
    """Candidates (descending, multiples of 128) that evenly divide `dim`."""
    out = [c for c in candidates if dim % c == 0]
    return out if out else [128]  # dim is always a multiple of 128 here


def prepare_weight(w, compute_dtype=None):
    """One-time, host-side weight prep: torch [out, in] -> TPU-friendly [in, out].

    For repeated forward calls cache the result (or jit the whole forward so the
    transpose of the static weight is done once), instead of re-doing it per call.
    """
    w = jnp.asarray(w)
    if compute_dtype is not None:
        w = w.astype(compute_dtype)
    return w.T  # [K, N]; lane-dense in N inside the kernel


def _linear_acc_kernel(x_ref, w_ref, o_ref, acc_ref, *, precision=None):
    # x_ref: (tm, tk), w_ref: (tk, tn) [pre-transposed weight], acc_ref: (tm, tn) f32,
    # resident across the innermost ("arbitrary") K grid axis.
    @pl.when(pl.program_id(2) == 0)
    def _():
        acc_ref[...] = jnp.zeros_like(acc_ref)

    acc_ref[...] += jnp.dot(
        x_ref[...], w_ref[...],
        preferred_element_type=jnp.float32, precision=precision,
    )

    @pl.when(pl.program_id(2) == pl.num_programs(2) - 1)
    def _():
        o_ref[...] = acc_ref[...].astype(o_ref.dtype)


def _linear_noacc_kernel(x_ref, w_ref, o_ref, *, precision=None):
    # Single K step: write the MXU result straight to the output tile
    # (no scratch accumulator read-modify-write, no extra copy/cast pass).
    o_ref[...] = jnp.dot(
        x_ref[...], w_ref[...],
        preferred_element_type=jnp.float32, precision=precision,
    ).astype(o_ref.dtype)


def loadable_linear(x, w, *, compute_dtype=None, precision=None,
                    tm=512, tn=512, tk=2048):
    """Pallas equivalent of F.linear(x, w) with no bias.

    x: [..., K]  activations
    w: [N, K]    weight in torch nn.Linear layout (out_features, in_features)
    compute_dtype: optional operand dtype (e.g. jnp.bfloat16) — MXU-native,
                   halves memory traffic; accumulation stays f32.
    returns [..., N]
    """
    *lead, K = x.shape
    N, K_w = w.shape
    assert K_w == K, f"in_features mismatch: x has {K}, weight has {K_w}"
    M = math.prod(lead) if lead else 1

    out_dtype = jnp.result_type(x.dtype, w.dtype)
    if M == 0:  # degenerate: empty leading dims
        return jnp.zeros((*lead, N), out_dtype)

    if compute_dtype is not None:
        x = x.astype(compute_dtype)
    wt = prepare_weight(w, compute_dtype)  # [K, N]
    x2 = x.reshape(M, K)

    x_item = jnp.dtype(x2.dtype).itemsize
    w_item = jnp.dtype(wt.dtype).itemsize
    out_item = jnp.dtype(out_dtype).itemsize
    sub_x = _sublane_multiple(x2.dtype)

    # N / K padded to lane multiples of 128 (a no-op for typical transformer dims).
    Np = _round_up(N, 128)
    Kp = _round_up(K, 128)

    def buf_bytes(tm_, tn_, tk_, with_acc):
        b = (2 * tm_ * tk_ * x_item       # double-buffered x tile
             + 2 * tk_ * tn_ * w_item     # double-buffered w tile
             + 2 * tm_ * tn_ * out_item)  # double-buffered out tile
        if with_acc:
            b += tm_ * tn_ * 4            # f32 accumulator scratch
        return b

    # ---- tile selection -------------------------------------------------
    skinny = M <= 64
    if skinny:
        # Decode-like shapes: collapse the K grid axis (weight streamed from HBM
        # exactly once), wide lane-dense N tiles, no scratch accumulator.
        tm_s = _round_up(M, sub_x)
        tk_s = Kp
        tn_s = None
        for cand in _divisor_tiles(Np, (512, 384, 256, 128)):
            if buf_bytes(tm_s, cand, tk_s, False) <= _VMEM_BUDGET:
                tn_s = cand
                break
        if tn_s is None:
            skinny = False  # K too large to hold whole rows; fall back to tiling K
        else:
            tm, tn, tk = tm_s, tn_s, tk_s
            Mp = _round_up(M, tm)

    if not skinny:
        # Balance tm across M so padding waste stays below one sublane group.
        tm = max(sub_x, min(tm, _round_up(M, sub_x)))
        tm = _round_up(_cdiv(M, _cdiv(M, tm)), sub_x)
        Mp = _round_up(M, tm)

        tn_ladder = _divisor_tiles(Np, (512, 384, 256, 128))
        tk_ladder = _divisor_tiles(Kp, (2048, 1024, 512, 256, 128))
        tn = next((c for c in tn_ladder if c <= max(tn, 128)), tn_ladder[-1])
        tk = next((c for c in tk_ladder if c <= max(tk, 128)), tk_ladder[-1])
        # Shrink K tile first, then N tile, if over the VMEM budget.
        while buf_bytes(tm, tn, tk, True) > _VMEM_BUDGET and tk > tk_ladder[-1]:
            tk = next(c for c in tk_ladder if c < tk)
        while buf_bytes(tm, tn, tk, True) > _VMEM_BUDGET and tn > tn_ladder[-1]:
            tn = next(c for c in tn_ladder if c < tn)

    # ---- v7x: make sure at least one "parallel" axis has >= 2 blocks -----
    if Mp // tm == 1 and Np // tn == 1:
        n_split = [c for c in _divisor_tiles(Np, (512, 384, 256, 128)) if c < Np]
        if n_split:
            tn = n_split[0]
        elif M > sub_x:
            tm = _round_up(_cdiv(M, 2), sub_x)
            Mp = _round_up(M, tm)

    nm, nn, nk = Mp // tm, Np // tn, Kp // tk

    # ---- padding (weight pad is a no-op for aligned dims; cache it for
    # repeated calls via prepare_weight / jit) -----------------------------
    if (Mp, Kp) != (M, K):
        x2 = jnp.pad(x2, ((0, Mp - M), (0, Kp - K)))
    if (Kp, Np) != (K, N):
        wt = jnp.pad(wt, ((0, Kp - K), (0, Np - N)))

    # ---- kernel / scratch / cost / vmem limit ----------------------------
    if nk == 1:
        kernel = partial(_linear_noacc_kernel, precision=precision)
        scratch = []
        total_buf = buf_bytes(tm, tn, tk, False)
    else:
        kernel = partial(_linear_acc_kernel, precision=precision)
        scratch = [pltpu.VMEM((tm, tn), jnp.float32)]
        total_buf = buf_bytes(tm, tn, tk, True)

    cost = pl.CostEstimate(
        flops=2 * Mp * Np * Kp,
        transcendentals=0,
        # account for HBM re-streaming: x is re-read once per N tile,
        # w once per M tile.
        bytes_accessed=nn * Mp * Kp * x_item
        + nm * Kp * Np * w_item
        + Mp * Np * out_item,
    )
    vmem_limit = min(_VMEM_LIMIT_CAP, total_buf + _VMEM_HEADROOM)

    out = pl.pallas_call(
        kernel,
        out_shape=jax.ShapeDtypeStruct((Mp, Np), out_dtype),
        grid_spec=pltpu.PrefetchScalarGridSpec(
            num_scalar_prefetch=0,
            grid=(nm, nn, nk),
            in_specs=[
                pl.BlockSpec((tm, tk), lambda i, j, k: (i, k)),  # activations [M, K]
                pl.BlockSpec((tk, tn), lambda i, j, k: (k, j)),  # weight [K, N] (pre-transposed)
            ],
            out_specs=pl.BlockSpec((tm, tn), lambda i, j, k: (i, j)),
            scratch_shapes=scratch,
        ),
        compiler_params=pltpu.CompilerParams(
            dimension_semantics=("parallel", "parallel", "arbitrary"),
            vmem_limit_bytes=vmem_limit,
        ),
        cost_estimate=cost,
    )(x2, wt)

    if (Mp, Np) != (M, N):
        out = out[:M, :N]
    return out.reshape(*lead, N)


if __name__ == "__main__":
    # Small shapes consistent with a Linear forward inside a transformer block.
    B, S = 2, 8          # batch, sequence
    K, N = 256, 512      # in_features, out_features

    key = jax.random.PRNGKey(0)
    kx, kw = jax.random.split(key)

    x = jax.random.normal(kx, (B, S, K), dtype=jnp.float32)
    # Deterministic synthetic "checkpoint" weight in torch layout [out, in].
    w = jax.random.normal(kw, (N, K), dtype=jnp.float32) * 0.02

    # 1) Skinny-M (decode-like) path: M = 16 <= 64, single K step, no accumulator.
    out = jax.block_until_ready(loadable_linear(x, w))
    ref = jnp.einsum("bsk,nk->bsn", x, w)
    assert out.shape == (B, S, N)
    assert jnp.allclose(out, ref, atol=1e-2, rtol=1e-2)

    # 2) General path: larger M; tk=128 forces >1 K step to exercise the
    #    f32 VMEM accumulator kernel and the 2-TensorCore parallel split.
    x_big = jax.random.normal(kx, (2, 96, K), dtype=jnp.float32)
    out_big = jax.block_until_ready(loadable_linear(x_big, w, tk=128))
    ref_big = jnp.einsum("bsk,nk->bsn", x_big, w)
    assert jnp.allclose(out_big, ref_big, atol=1e-2, rtol=1e-2)

    # 3) bf16 operand path (MXU-native, f32 accumulation).
    out_bf16 = jax.block_until_ready(loadable_linear(x, w, compute_dtype=jnp.bfloat16))
    assert jnp.allclose(out_bf16, ref, atol=5e-2, rtol=5e-2)

    print("KERNEL_OK")
</pallas_src>

<mosaic_0001>
module attributes {stable_mosaic.version = 11 : i64} {
  func.func @_linear_noacc_kernel(%arg0: i32, %arg1: i32, %arg2: i32, %arg3: memref<16x256xf32, #tpu.memory_space<vmem>>, %arg4: memref<256x256xf32, #tpu.memory_space<vmem>>, %arg5: memref<16x256xf32, #tpu.memory_space<vmem>>) attributes {dimension_semantics = [#tpu.dimension_semantics<parallel>, #tpu.dimension_semantics<parallel>, #tpu.dimension_semantics<arbitrary>], iteration_bounds = array<i64: 1, 2, 1>, scalar_prefetch = 0 : i64, scratch_operands = 0 : i64, tpu.core_type = #tpu.core_type<tc>, window_params = [{transform_indices = @transform_0, window_bounds = array<i64: 16, 256>}, {transform_indices = @transform_1, window_bounds = array<i64: 256, 256>}, {transform_indices = @transform_2, window_bounds = array<i64: 16, 256>}]} {
    %c0 = arith.constant 0 : index
    %c0_0 = arith.constant 0 : index
    %0 = vector.load %arg3[%c0, %c0_0] : memref<16x256xf32, #tpu.memory_space<vmem>>, vector<16x256xf32>
    %c0_1 = arith.constant 0 : index
    %c0_2 = arith.constant 0 : index
    %1 = vector.load %arg4[%c0_1, %c0_2] : memref<256x256xf32, #tpu.memory_space<vmem>>, vector<256x256xf32>
    %cst = arith.constant dense<0.000000e+00> : vector<16x256xf32>
    %2 = tpu.matmul %0, %1, %cst {dimension_numbers = #tpu.dot_dimension_numbers<[1], [0], [0], [1], [0, 0, 1, 1], [], []>} : vector<16x256xf32>, vector<256x256xf32>, vector<16x256xf32> -> vector<16x256xf32>
    %c0_3 = arith.constant 0 : index
    %c0_4 = arith.constant 0 : index
    %3 = vector.load %arg5[%c0_3, %c0_4] : memref<16x256xf32, #tpu.memory_space<vmem>>, vector<16x256xf32>
    tpu.vector_store %arg5[%c0_3, %c0_4], %2 {strides = array<i32>} : memref<16x256xf32, #tpu.memory_space<vmem>>, vector<16x256xf32>,
    return
  }
  func.func @transform_0(%arg0: i32, %arg1: i32, %arg2: i32) -> (i32, i32) {
    %c0_i32 = arith.constant 0 : i32
    return %arg0, %arg2 : i32, i32
  }
  func.func @transform_1(%arg0: i32, %arg1: i32, %arg2: i32) -> (i32, i32) {
    %c0_i32 = arith.constant 0 : i32
    return %arg2, %arg1 : i32, i32
  }
  func.func @transform_2(%arg0: i32, %arg1: i32, %arg2: i32) -> (i32, i32) {
    %c0_i32 = arith.constant 0 : i32
    return %arg0, %arg1 : i32, i32
  }
}

</mosaic_0001>

<llo_original>
// kernel: tpu_custom_call.1
$region0: #{tpu_custom_call.1}
  #allocation0 [shape = 'u32[]', space=smem, size = 0x4, offset = 0x4, fixed_abs, tag = 'smem constant byte address 0x4 - core index']
  #allocation1 [shape = 'u32[72,128]{1,0:T(1,128)}', space=vmem, size = 0x9000, scoped, tag = 'internal scratch']
  %s0 = inlined_call_operand.hbm [shape: f32[16,256], index: 0, kind: input, shape index: {}]
  %s1 = inlined_call_operand.hbm [shape: f32[256,512], index: 1, kind: input, shape index: {}]
  %s2 = inlined_call_operand.hbm [shape: f32[16,512], index: 2, kind: output, shape index: {}]
  %s3 = sld [smem:[#allocation0]]
  $region49: #{tpu_custom_call.1} parent=0
    _
  %s5 = ssub.s32 1, %s3
  %s6 = scalar_select 0, %s5, %s3
  $region1: #{tpu_custom_call.1} parent=0
    #allocation2 [shape = 'u8[16384]{0}', space=vmem, size = 0x4000, scoped, tag = 'input window, operand 0, single buffered']
    #allocation3 [shape = 's32[2]{0}', space=sflag, size = 0x8, scoped, tag = 'scoped memory for tpu_custom_call.1']
    #allocation4 [shape = 's32[2]{0}', space=sflag, size = 0x8, scoped, tag = 'scoped memory for tpu_custom_call.1']
    #allocation5 [shape = 'u8[524288]{0}', space=vmem, size = 0x80000, scoped, tag = 'input window, operand 1']
    #allocation6 [shape = 's32[2]{0}', space=sflag, size = 0x8, scoped, tag = 'scoped memory for tpu_custom_call.1']
    #allocation7 [shape = 'u8[32768]{0}', space=vmem, size = 0x8000, scoped, tag = 'output window, operand 0']
    %7 = vsyncpa [#allocation3], 0
    %8 = vsyncpa [#allocation6], 0
    %s9 = scalar_lea.sflag [#allocation6], 1
    %10 = vsyncpa %s9, 0
    %11 = vsyncpa [#allocation4], 0
    %s12 = scalar_lea.sflag [#allocation4], 1
    %13 = vsyncpa %s12, 0
    loop: start=0, step=1, limit=4
    $region2: #{tpu_custom_call.1} parent=1 // loop_pre_header
      _
    $region3: #{tpu_custom_call.1} parent=1 // loop_header
      %s15 = sphi 0, %s19
      %p16 = scmp.ge.s32.totalorder %s15, 4
      %s22 = sphi 0, %s41
      %s23 = sphi 0, %s37
      %s24 = sphi 0, %s33
      %s25 = sphi 0, %s22
      %s26 = sphi 0, %s23
      %s27 = sphi 0, %s24
      %s28 = sphi 0, %s25
      %s29 = sphi 0, %s26
      %s30 = sphi 0, %s27
      %s46 = sphi 0, %s48
      %s49 = sphi 0, %s46
      %s50 = sphi 0, %s49
      %s66 = sphi 0, %s50
      %s74 = sphi 0, %s76
      %s77 = sphi 0, %s74
      %s78 = sphi 0, %s77
      %s94 = sphi 0, %s78
      %s102 = sphi 0, %s104
      %s105 = sphi 0, %s102
      %s106 = sphi 0, %s105
      %s122 = sphi 0, %s106
    $region4: #{tpu_custom_call.1} parent=1 // loop_header_branch
      %18 = sbr.rel (%p16) target = $region8
    $region5: #{tpu_custom_call.1} parent=1 // loop_body
      %s20 = ssub.s32 %s15, 1
      %s21 = ssub.s32 %s15, 2
      %s31 = sadd.s32 1, %s24
      %p32 = scmp.ge.s32.totalorder %s31, 1
      %s33 = scalar_select %p32, 0, %s31
      %s34 = sadd.s32 1, %s23
      %s35 = scalar_select %p32, %s34, %s23
      %p36 = scmp.ge.s32.totalorder %s35, 2
      %s37 = scalar_select %p36, 0, %s35
      %s38 = sadd.s32 1, %s22
      %s39 = scalar_select %p36, %s38, %s22
      %p40 = scmp.ge.s32.totalorder %s39, 1
      %s41 = scalar_select %p40, 0, %s39
      %s42 = ssub.s32 %s22, %s41
      %s43 = ssub.s32 %s24, %s33
      %s44 = sor.u32 %s42, %s43
      %p45 = scmp.eq.s32.totalorder %s44, 0
      %s47 = sadd.s32 %s46, 1
      %s48 = scalar_select %p45, %s46, %s47
      %p51 = pneg %p45
      %p52 = scmp.eq.s32.totalorder %s15, 1
      %p53 = por %p51, %p52
      %p54 = scmp.ne.s32.totalorder %s46, %s49
      %p55 = scmp.eq.s32.totalorder %s15, 0
      %p56 = por %p54, %p55
      %p57 = scmp.ne.s32.totalorder %s46, %s49
      %p58 = scmp.eq.s32.totalorder %s20, 1
      %p59 = por %p57, %p58
      %p60 = scmp.ne.s32.totalorder %s49, %s50
      %p61 = scmp.eq.s32.totalorder %s20, 0
      %p62 = por %p60, %p61
      %p63 = scmp.ne.s32.totalorder %s49, %s50
      %p64 = scmp.eq.s32.totalorder %s21, 1
      %p65 = por %p63, %p64
      %p67 = scmp.ne.s32.totalorder %s50, %s66
      %p68 = scmp.eq.s32.totalorder %s21, 0
      %p69 = por %p67, %p68
      %s70 = ssub.s32 %s24, %s33
      %s71 = ssub.s32 %s23, %s37
      %s72 = sor.u32 %s70, %s71
      %p73 = scmp.eq.s32.totalorder %s72, 0
      %s75 = sadd.s32 %s74, 1
      %s76 = scalar_select %p73, %s74, %s75
      %p79 = pneg %p73
      %p80 = scmp.eq.s32.totalorder %s15, 1
      %p81 = por %p79, %p80
      %p82 = scmp.ne.s32.totalorder %s74, %s77
      %p83 = scmp.eq.s32.totalorder %s15, 0
      %p84 = por %p82, %p83
      %p85 = scmp.ne.s32.totalorder %s74, %s77
      %p86 = scmp.eq.s32.totalorder %s20, 1
      %p87 = por %p85, %p86
      %p88 = scmp.ne.s32.totalorder %s77, %s78
      %p89 = scmp.eq.s32.totalorder %s20, 0
      %p90 = por %p88, %p89
      %p91 = scmp.ne.s32.totalorder %s77, %s78
      %p92 = scmp.eq.s32.totalorder %s21, 1
      %p93 = por %p91, %p92
      %p95 = scmp.ne.s32.totalorder %s78, %s94
      %p96 = scmp.eq.s32.totalorder %s21, 0
      %p97 = por %p95, %p96
      %s98 = ssub.s32 %s22, %s41
      %s99 = ssub.s32 %s23, %s37
      %s100 = sor.u32 %s98, %s99
      %p101 = scmp.eq.s32.totalorder %s100, 0
      %s103 = sadd.s32 %s102, 1
      %s104 = scalar_select %p101, %s102, %s103
      %p107 = pneg %p101
      %p108 = scmp.eq.s32.totalorder %s15, 1
      %p109 = por %p107, %p108
      %p110 = scmp.ne.s32.totalorder %s102, %s105
      %p111 = scmp.eq.s32.totalorder %s15, 0
      %p112 = por %p110, %p111
      %p113 = scmp.ne.s32.totalorder %s102, %s105
      %p114 = scmp.eq.s32.totalorder %s20, 1
      %p115 = por %p113, %p114
      %p116 = scmp.ne.s32.totalorder %s105, %s106
      %p117 = scmp.eq.s32.totalorder %s20, 0
      %p118 = por %p116, %p117
      %p119 = scmp.ne.s32.totalorder %s105, %s106
      %p120 = scmp.eq.s32.totalorder %s21, 1
      %p121 = por %p119, %p120
      %p123 = scmp.ne.s32.totalorder %s106, %s122
      %p124 = scmp.eq.s32.totalorder %s21, 0
      %p125 = por %p123, %p124
      %p126 = scmp.le.s32.totalorder 1, %s15
      %p127 = scmp.lt.s32.totalorder %s15, 3
      %p128 = pnand %p126, %p127
      %p129 = pneg %p128
      // Predicated region
      $region9: #{tpu_custom_call.1} parent=5 // pred_check
        _
      $region10: #{tpu_custom_call.1} parent=5 // pred_check_branch
        %131 = sbr.rel (%p128) target = $region12
      $region11: #{tpu_custom_call.1} parent=5 // pred_region
        %s132 = ssub.s32 %s15, 1
        // Predicated region
        $region13: #{tpu_custom_call.1} parent=11 // pred_check
          %p133 = pneg %p62
        $region14: #{tpu_custom_call.1} parent=11 // pred_check_branch
          %135 = sbr.rel (%p133) target = $region16
        $region15: #{tpu_custom_call.1} parent=11 // pred_region
          %s136 = smul.u32 2, %s25
          %s137 = smul.u32 2, %s27
          %139 = vsyncadd [#allocation3], 0
          %s140 = smul.addr %s136, 2
          %s141 = sadd.s32 %s137, %s140
          %s142 = smul.addr %s141, 8
          %s143 = scalar_lea.hbm %s0, %s142
          %s144 = sshll.u32 %s143, 4
          %s145 = int_to_ptr.hbm [resolvable:$true] %s144
          %s146 = sshll.u32 [#allocation2], 4
          %s147 = int_to_ptr.vmem [resolvable:$true] %s146
          %152 = dma.hbm_to_vmem [thread:$0]  %s145, 512, %s147, [#allocation3], 256, 256, 16
        $region16: #{tpu_custom_call.1} parent=11 // pred_fallthru
          _
      $region12: #{tpu_custom_call.1} parent=5 // pred_fallthru
        _
      %p153 = scmp.lt.s32.totalorder %s15, 2
      // Predicated region
      $region17: #{tpu_custom_call.1} parent=5 // pred_check
        %p154 = pneg %p153
      $region18: #{tpu_custom_call.1} parent=5 // pred_check_branch
        %156 = sbr.rel (%p154) target = $region20
      $region19: #{tpu_custom_call.1} parent=5 // pred_region
        // Predicated region
        $region21: #{tpu_custom_call.1} parent=19 // pred_check
          %p157 = pneg %p84
        $region22: #{tpu_custom_call.1} parent=19 // pred_check_branch
          %159 = sbr.rel (%p157) target = $region24
        $region23: #{tpu_custom_call.1} parent=19 // pred_region
          %s160 = sand.u32 %s74, 1
          %s161 = scalar_lea.sflag [#allocation6], %s160
          %s162 = sand.u32 %s74, 1
          %s163 = smul.addr %s162, 512
          %s164 = scalar_lea.vmem [#allocation5], %s163
          %s165 = smul.u32 32, %s24
          %s166 = smul.u32 2, %s23
          %168 = vsyncadd %s161, 0
          %s169 = smul.addr %s165, 4
          %s170 = sadd.s32 %s166, %s169
          %s171 = smul.addr %s170, 8
          %s172 = scalar_lea.hbm %s1, %s171
          %s173 = sshll.u32 %s172, 4
          %s174 = int_to_ptr.hbm [resolvable:$true] %s173
          %s175 = sshll.u32 %s164, 4
          %s176 = int_to_ptr.vmem [resolvable:$true] %s175
          %181 = dma.hbm_to_vmem [thread:$0]  %s174, 8192, %s176, %s161, 512, 256, 16
        $region24: #{tpu_custom_call.1} parent=19 // pred_fallthru
          _
      $region20: #{tpu_custom_call.1} parent=5 // pred_fallthru
        _
      %p182 = scmp.le.s32.totalorder 1, %s15
      %p183 = scmp.lt.s32.totalorder %s15, 3
      %p184 = pnand %p182, %p183
      %p185 = pneg %p184
      // Predicated region
      $region25: #{tpu_custom_call.1} parent=5 // pred_check
        _
      $region26: #{tpu_custom_call.1} parent=5 // pred_check_branch
        %187 = sbr.rel (%p184) target = $region28
      $region27: #{tpu_custom_call.1} parent=5 // pred_region
        %s188 = ssub.s32 %s15, 1
        // Predicated region
        $region29: #{tpu_custom_call.1} parent=27 // pred_check
          %p189 = pneg %p62
        $region30: #{tpu_custom_call.1} parent=27 // pred_check_branch
          %191 = sbr.rel (%p189) target = $region32
        $region31: #{tpu_custom_call.1} parent=27 // pred_region
          %193 = dma.done [#allocation3], 512
        $region32: #{tpu_custom_call.1} parent=27 // pred_fallthru
          _
        %s194 = sand.u32 %s77, 1
        %s195 = scalar_lea.sflag [#allocation6], %s194
        %s196 = sand.u32 %s77, 1
        %s197 = smul.addr %s196, 512
        %s198 = scalar_lea.vmem [#allocation5], %s197
        // Predicated region
        $region33: #{tpu_custom_call.1} parent=27 // pred_check
          %p199 = pneg %p90
        $region34: #{tpu_custom_call.1} parent=27 // pred_check_branch
          %201 = sbr.rel (%p199) target = $region36
        $region35: #{tpu_custom_call.1} parent=27 // pred_region
          %203 = dma.done %s195, 8192
        $region36: #{tpu_custom_call.1} parent=27 // pred_fallthru
          _
        %p204 = pneg %p62
        %p205 = pneg %p59
        %s206 = sand.u32 %s77, 1
        %s207 = scalar_lea.sflag [#allocation6], %s206
        %s208 = sand.u32 %s77, 1
        %s209 = smul.addr %s208, 512
        %s210 = scalar_lea.vmem [#allocation5], %s209
        %p211 = pneg %p90
        %p212 = pneg %p87
        %p213 = pneg %p118
        %p214 = pneg %p115
        %s215 = sand.u32 %s105, 1
        %s216 = scalar_lea.sflag [#allocation4], %s215
        %s217 = sand.u32 %s105, 1
        %s218 = smul.addr %s217, 32
        %s219 = scalar_lea.vmem [#allocation7], %s218
        %s220 = smul.u32 2, %s25
        %s221 = smul.u32 2, %s27
        %s222 = smul.u32 32, %s27
        %s223 = smul.u32 2, %s26
        %s224 = smul.u32 2, %s25
        %s225 = smul.u32 2, %s26
        %v226 = vld [vmem:[#allocation2] sm:$0xff]
        %v227 = vld [vmem:[#allocation2 + $0x8] sm:$0xff]
        %v228 = vld [vmem:[#allocation2 + $0x10] sm:$0xff]
        %v229 = vld [vmem:[#allocation2 + $0x18] sm:$0xff]
        %v230 = vld [vmem:[%s198] sm:$0xff]
        %v231 = vld [vmem:[%s198 + $0x8] sm:$0xff]
        %v232 = vld [vmem:[%s198 + $0x10] sm:$0xff]
        %v233 = vld [vmem:[%s198 + $0x18] sm:$0xff]
        %v234 = vld [vmem:[%s198 + $0x20] sm:$0xff]
        %v235 = vld [vmem:[%s198 + $0x28] sm:$0xff]
        %v236 = vld [vmem:[%s198 + $0x30] sm:$0xff]
        %v237 = vld [vmem:[%s198 + $0x38] sm:$0xff]
        %v238 = vld [vmem:[%s198 + $0x40] sm:$0xff]
        %v239 = vld [vmem:[%s198 + $0x48] sm:$0xff]
        %v240 = vld [vmem:[%s198 + $0x50] sm:$0xff]
        %v241 = vld [vmem:[%s198 + $0x58] sm:$0xff]
        %v242 = vld [vmem:[%s198 + $0x60] sm:$0xff]
        %v243 = vld [vmem:[%s198 + $0x68] sm:$0xff]
        %v244 = vld [vmem:[%s198 + $0x70] sm:$0xff]
        %v245 = vld [vmem:[%s198 + $0x78] sm:$0xff]
        %v246 = vld [vmem:[%s198 + $0x80] sm:$0xff]
        %v247 = vld [vmem:[%s198 + $0x88] sm:$0xff]
        %v248 = vld [vmem:[%s198 + $0x90] sm:$0xff]
        %v249 = vld [vmem:[%s198 + $0x98] sm:$0xff]
        %v250 = vld [vmem:[%s198 + $0xa0] sm:$0xff]
        %v251 = vld [vmem:[%s198 + $0xa8] sm:$0xff]
        %v252 = vld [vmem:[%s198 + $0xb0] sm:$0xff]
        %v253 = vld [vmem:[%s198 + $0xb8] sm:$0xff]
        %v254 = vld [vmem:[%s198 + $0xc0] sm:$0xff]
        %v255 = vld [vmem:[%s198 + $0xc8] sm:$0xff]
        %v256 = vld [vmem:[%s198 + $0xd0] sm:$0xff]
        %v257 = vld [vmem:[%s198 + $0xd8] sm:$0xff]
        %v258 = vld [vmem:[%s198 + $0xe0] sm:$0xff]
        %v259 = vld [vmem:[%s198 + $0xe8] sm:$0xff]
        %v260 = vld [vmem:[%s198 + $0xf0] sm:$0xff]
        %v261 = vld [vmem:[%s198 + $0xf8] sm:$0xff]
        %v262 = vld [vmem:[%s198 + $0x100] sm:$0xff]
        %v263 = vld [vmem:[%s198 + $0x108] sm:$0xff]
        %v264 = vld [vmem:[%s198 + $0x110] sm:$0xff]
        %v265 = vld [vmem:[%s198 + $0x118] sm:$0xff]
        %v266 = vld [vmem:[%s198 + $0x120] sm:$0xff]
        %v267 = vld [vmem:[%s198 + $0x128] sm:$0xff]
        %v268 = vld [vmem:[%s198 + $0x130] sm:$0xff]
        %v269 = vld [vmem:[%s198 + $0x138] sm:$0xff]
        %v270 = vld [vmem:[%s198 + $0x140] sm:$0xff]
        %v271 = vld [vmem:[%s198 + $0x148] sm:$0xff]
        %v272 = vld [vmem:[%s198 + $0x150] sm:$0xff]
        %v273 = vld [vmem:[%s198 + $0x158] sm:$0xff]
        %v274 = vld [vmem:[%s198 + $0x160] sm:$0xff]
        %v275 = vld [vmem:[%s198 + $0x168] sm:$0xff]
        %v276 = vld [vmem:[%s198 + $0x170] sm:$0xff]
        %v277 = vld [vmem:[%s198 + $0x178] sm:$0xff]
        %v278 = vld [vmem:[%s198 + $0x180] sm:$0xff]
        %v279 = vld [vmem:[%s198 + $0x188] sm:$0xff]
        %v280 = vld [vmem:[%s198 + $0x190] sm:$0xff]
        %v281 = vld [vmem:[%s198 + $0x198] sm:$0xff]
        %v282 = vld [vmem:[%s198 + $0x1a0] sm:$0xff]
        %v283 = vld [vmem:[%s198 + $0x1a8] sm:$0xff]
        %v284 = vld [vmem:[%s198 + $0x1b0] sm:$0xff]
        %v285 = vld [vmem:[%s198 + $0x1b8] sm:$0xff]
        %v286 = vld [vmem:[%s198 + $0x1c0] sm:$0xff]
        %v287 = vld [vmem:[%s198 + $0x1c8] sm:$0xff]
        %v288 = vld [vmem:[%s198 + $0x1d0] sm:$0xff]
        %v289 = vld [vmem:[%s198 + $0x1d8] sm:$0xff]
        %v290 = vld [vmem:[%s198 + $0x1e0] sm:$0xff]
        %v291 = vld [vmem:[%s198 + $0x1e8] sm:$0xff]
        %v292 = vld [vmem:[%s198 + $0x1f0] sm:$0xff]
        %v293 = vld [vmem:[%s198 + $0x1f8] sm:$0xff]
        %294 = vmatpush.msra.mxu0 %v260
        %295 = vmatpush.msra.mxu0 %v258
        %296 = vmatpush.msra.mxu0 %v256
        %297 = vmatpush.msra.mxu0 %v254
        %298 = vmatpush.msra.mxu0 %v252
        %299 = vmatpush.msra.mxu0 %v250
        %300 = vmatpush.msra.mxu0 %v248
        %301 = vmatpush.msra.mxu0 %v246
        %302 = vmatpush.msra.mxu0 %v244
        %303 = vmatpush.msra.mxu0 %v242
        %304 = vmatpush.msra.mxu0 %v240
        %305 = vmatpush.msra.mxu0 %v238
        %306 = vmatpush.msra.mxu0 %v236
        %307 = vmatpush.msra.mxu0 %v234
        %308 = vmatpush.msra.mxu0 %v232
        %309 = vmatpush.msra.mxu0 %v230
        %310 = vmatmul.f32.gmra.mxu0 %v226
        %v311 = vpop.f32.mrf.mxu0
        %v312 = vadd.f32 0.0, %v311
        %313 = vmatmul.f32.gmra.mxu0 %v228
        %v314 = vpop.f32.mrf.mxu0
        %v315 = vadd.f32 0.0, %v314
        %316 = vdwg.mxu0
        %317 = vmatpush.msra.mxu0 %v292
        %318 = vmatpush.msra.mxu0 %v290
        %319 = vmatpush.msra.mxu0 %v288
        %320 = vmatpush.msra.mxu0 %v286
        %321 = vmatpush.msra.mxu0 %v284
        %322 = vmatpush.msra.mxu0 %v282
        %323 = vmatpush.msra.mxu0 %v280
        %324 = vmatpush.msra.mxu0 %v278
        %325 = vmatpush.msra.mxu0 %v276
        %326 = vmatpush.msra.mxu0 %v274
        %327 = vmatpush.msra.mxu0 %v272
        %328 = vmatpush.msra.mxu0 %v270
        %329 = vmatpush.msra.mxu0 %v268
        %330 = vmatpush.msra.mxu0 %v266
        %331 = vmatpush.msra.mxu0 %v264
        %332 = vmatpush.msra.mxu0 %v262
        %333 = vmatmul.f32.gmra.mxu0 %v227
        %v334 = vpop.f32.mrf.mxu0
        %v335 = vadd.f32 %v312, %v334
        %336 = vmatmul.f32.gmra.mxu0 %v229
        %v337 = vpop.f32.mrf.mxu0
        %v338 = vadd.f32 %v315, %v337
        %339 = vdwg.mxu0
        %340 = vmatpush.msra.mxu0 %v261
        %341 = vmatpush.msra.mxu0 %v259
        %342 = vmatpush.msra.mxu0 %v257
        %343 = vmatpush.msra.mxu0 %v255
        %344 = vmatpush.msra.mxu0 %v253
        %345 = vmatpush.msra.mxu0 %v251
        %346 = vmatpush.msra.mxu0 %v249
        %347 = vmatpush.msra.mxu0 %v247
        %348 = vmatpush.msra.mxu0 %v245
        %349 = vmatpush.msra.mxu0 %v243
        %350 = vmatpush.msra.mxu0 %v241
        %351 = vmatpush.msra.mxu0 %v239
        %352 = vmatpush.msra.mxu0 %v237
        %353 = vmatpush.msra.mxu0 %v235
        %354 = vmatpush.msra.mxu0 %v233
        %355 = vmatpush.msra.mxu0 %v231
        %356 = vmatmul.f32.gmra.mxu0 %v226
        %v357 = vpop.f32.mrf.mxu0
        %v358 = vadd.f32 0.0, %v357
        %359 = vmatmul.f32.gmra.mxu0 %v228
        %v360 = vpop.f32.mrf.mxu0
        %v361 = vadd.f32 0.0, %v360
        %362 = vdwg.mxu0
        %363 = vmatpush.msra.mxu0 %v293
        %364 = vmatpush.msra.mxu0 %v291
        %365 = vmatpush.msra.mxu0 %v289
        %366 = vmatpush.msra.mxu0 %v287
        %367 = vmatpush.msra.mxu0 %v285
        %368 = vmatpush.msra.mxu0 %v283
        %369 = vmatpush.msra.mxu0 %v281
        %370 = vmatpush.msra.mxu0 %v279
        %371 = vmatpush.msra.mxu0 %v277
        %372 = vmatpush.msra.mxu0 %v275
        %373 = vmatpush.msra.mxu0 %v273
        %374 = vmatpush.msra.mxu0 %v271
        %375 = vmatpush.msra.mxu0 %v269
        %376 = vmatpush.msra.mxu0 %v267
        %377 = vmatpush.msra.mxu0 %v265
        %378 = vmatpush.msra.mxu0 %v263
        %379 = vmatmul.f32.gmra.mxu0 %v227
        %v380 = vpop.f32.mrf.mxu0
        %v381 = vadd.f32 %v358, %v380
        %382 = vmatmul.f32.gmra.mxu0 %v229
        %v383 = vpop.f32.mrf.mxu0
        %v384 = vadd.f32 %v361, %v383
        %385 = vdwg.mxu0
        %386 = vst [vmem:[%s219] sm:$0xff] %v335
        %387 = vst [vmem:[%s219 + $0x8] sm:$0xff] %v381
        %388 = vst [vmem:[%s219 + $0x10] sm:$0xff] %v338
        %389 = vst [vmem:[%s219 + $0x18] sm:$0xff] %v384
        %s390 = sand.u32 %s105, 1
        %s391 = scalar_lea.sflag [#allocation4], %s390
        %s392 = sand.u32 %s105, 1
        %s393 = smul.addr %s392, 32
        %s394 = scalar_lea.vmem [#allocation7], %s393
        // Predicated region
        $region37: #{tpu_custom_call.1} parent=27 // pred_check
          %p395 = pneg %p115
        $region38: #{tpu_custom_call.1} parent=27 // pred_check_branch
          %397 = sbr.rel (%p395) target = $region40
        $region39: #{tpu_custom_call.1} parent=27 // pred_region
          %s398 = smul.u32 2, %s25
          %s399 = smul.u32 2, %s26
          %401 = vsyncadd %s391, 0
          %s402 = smul.addr %s398, 4
          %s403 = sadd.s32 %s399, %s402
          %s404 = smul.addr %s403, 8
          %s405 = scalar_lea.hbm %s2, %s404
          %s406 = sshll.u32 %s394, 4
          %s407 = int_to_ptr.vmem [resolvable:$true] %s406
          %s408 = sshll.u32 %s405, 4
          %s409 = int_to_ptr.hbm [resolvable:$true] %s408
          %414 = dma.vmem_to_hbm [thread:$0]  %s407, 512, %s409, %s391, 256, 512, 16
        $region40: #{tpu_custom_call.1} parent=27 // pred_fallthru
          _
      $region28: #{tpu_custom_call.1} parent=5 // pred_fallthru
        _
      %p415 = scmp.le.s32.totalorder 2, %s15
      // Predicated region
      $region41: #{tpu_custom_call.1} parent=5 // pred_check
        %p416 = pneg %p415
      $region42: #{tpu_custom_call.1} parent=5 // pred_check_branch
        %418 = sbr.rel (%p416) target = $region44
      $region43: #{tpu_custom_call.1} parent=5 // pred_region
        %s419 = ssub.s32 %s15, 2
        // Predicated region
        $region45: #{tpu_custom_call.1} parent=43 // pred_check
          %p420 = pneg %p121
        $region46: #{tpu_custom_call.1} parent=43 // pred_check_branch
          %422 = sbr.rel (%p420) target = $region48
        $region47: #{tpu_custom_call.1} parent=43 // pred_region
          %s423 = sand.u32 %s106, 1
          %s424 = scalar_lea.sflag [#allocation4], %s423
          %s425 = sand.u32 %s106, 1
          %s426 = smul.addr %s425, 32
          %s427 = scalar_lea.vmem [#allocation7], %s426
          %429 = dma.done %s424, 512
        $region48: #{tpu_custom_call.1} parent=43 // pred_fallthru
          _
      $region44: #{tpu_custom_call.1} parent=5 // pred_fallthru
        _
    $region6: #{tpu_custom_call.1} parent=1 // loop_footer
      %s19 = sadd.s32 1, %s15
    $region7: #{tpu_custom_call.1} parent=1 // loop_footer_branch
      %14 = sbr.rel target = $region3
    $region8: #{tpu_custom_call.1} parent=1 // loop_exit
      _
    %430 = vsyncpa [#allocation3], 1
    %s431 = scalar_lea.sflag [#allocation3], 1
    %432 = vsyncpa %s431, 1
    %433 = vsyncpa [#allocation6], 1
    %s434 = scalar_lea.sflag [#allocation6], 1
    %435 = vsyncpa %s434, 1
    %436 = vsyncpa [#allocation4], 1
    %s437 = scalar_lea.sflag [#allocation4], 1
    %438 = vsyncpa %s437, 1

</llo_original>
